<compile_context>
chip_gen: v7x
topology: tpu7x:2x2x1
jax: 0.10.0
libtpu: 0.0.40
codegen_flags: <defaults>
</compile_context>

<pallas_src>
import jax
import jax.numpy as jnp
from jax.experimental import pallas as pl
from jax.experimental.pallas import tpu as pltpu


def _round_up(n, m):
    return ((n + m - 1) // m) * m


def _choose_batch_tile(B, tb_max=1024, min_steps=2):
    """Largest batch tile <= tb_max (fewer grid steps, less per-step overhead),
    but keep >= min_steps grid steps when the batch allows so the 'parallel'
    batch axis can shard across both v7x TensorCores.  Multiples of 16 so the
    same tile works for bf16 (16, 128) and f32 (8, 128) min tiles."""
    TB = min(tb_max, _round_up(B, 16))
    if B >= min_steps * 16:
        while pl.cdiv(B, TB) < min_steps and TB > 16:
            TB = _round_up(TB // 2, 16)
    return TB
    # NOTE: if tb_max is ever pushed past ~4k rows, also set
    # pltpu.CompilerParams(vmem_limit_bytes=...) — v7x scoped default is 32 MiB.


# ----------------------------------------------------------------------------
# Parameter packing — call ONCE at weight-load time (hoisted out of forward).
# ----------------------------------------------------------------------------
def pack_affordance_params(w1, b1, w2, b2, *, compute_dtype=None):
    """w1: [D, H]; b1: [H] or [1, H]; w2: [H, 1]; b2: [1] or [1, 1].
    Returns (w1, b1, w2t, b2) ready for affordance_forward."""
    assert w2.shape[1] == 1
    if compute_dtype is not None:
        w1 = w1.astype(compute_dtype)           # MXU operand (e.g. bf16)
    b1 = jnp.asarray(b1, jnp.float32).reshape(1, -1)
    w2t = jnp.asarray(w2, jnp.float32).T.reshape(1, -1)      # [1, H] lane-dense row
    b2 = jnp.asarray(b2, jnp.float32).reshape(1, 1)
    return w1, b1, w2t, b2


def pack_conditional_params(w1_all, b1_all, w2, b2, *, compute_dtype=None):
    """w1_all: [4, D, H]; b1_all: [4, H]; w2: [H, 1]; b2: [1] or [1, 1].
    Returns (w1p, b1p, w2t4, b2) ready for affordance_forward_conditional."""
    assert w2.shape[1] == 1
    n_exp, D, H = w1_all.shape
    # Pack experts on the lane axis: [D, 4H] -> one matmul for all experts.
    w1p = jnp.transpose(w1_all, (1, 0, 2)).reshape(D, n_exp * H)
    if compute_dtype is not None:
        w1p = w1p.astype(compute_dtype)
    b1p = jnp.asarray(b1_all, jnp.float32).reshape(1, n_exp * H)
    w2t4 = jnp.tile(jnp.asarray(w2, jnp.float32).T, (1, n_exp))  # [1, 4H]
    b2 = jnp.asarray(b2, jnp.float32).reshape(1, 1)
    return w1p, b1p, w2t4, b2


# ----------------------------------------------------------------------------
# Non-conditional path:  Linear(D,H) -> ReLU -> Dropout(id) -> Linear(H,1)
# ----------------------------------------------------------------------------
def _mlp_kernel(x_ref, w1_ref, b1_ref, w2t_ref, b2_ref, o_ref):
    x = x_ref[...]                                                    # [TB, D]
    # MXU matmul, f32 accumulate; bias/ReLU/reduce epilogue stays in f32.
    h = jnp.dot(x, w1_ref[...], preferred_element_type=jnp.float32) + b1_ref[...]
    h = jnp.maximum(h, 0.0)                                           # ReLU
    # Dropout(p) in eval mode == identity.
    out = jnp.sum(h * w2t_ref[...], axis=-1, keepdims=True) + b2_ref[...]
    o_ref[...] = out.astype(o_ref.dtype)


def affordance_forward(x, w1, b1, w2t, b2, *, tb_max=1024):
    """x: [B, D] (f32 or bf16);  packed params from pack_affordance_params."""
    B, D = x.shape
    H = w1.shape[1]
    assert w2t.shape == (1, H)

    TB = _choose_batch_tile(B, tb_max)
    grid = (pl.cdiv(B, TB),)                  # no wrapper-side pad; tail masked

    out = pl.pallas_call(
        _mlp_kernel,
        out_shape=jax.ShapeDtypeStruct((B, 1), jnp.float32),
        grid=grid,
        in_specs=[
            pl.BlockSpec((TB, D), lambda i: (i, 0)),
            # Resident weights/biases: constant index_map, single-buffered.
            pl.BlockSpec((D, H), lambda i: (0, 0), pipeline_mode=pl.Buffered(1)),
            pl.BlockSpec((1, H), lambda i: (0, 0), pipeline_mode=pl.Buffered(1)),
            pl.BlockSpec((1, H), lambda i: (0, 0), pipeline_mode=pl.Buffered(1)),
            pl.BlockSpec((1, 1), lambda i: (0, 0), pipeline_mode=pl.Buffered(1)),
        ],
        out_specs=pl.BlockSpec((TB, 1), lambda i: (i, 0)),
        compiler_params=pltpu.CompilerParams(dimension_semantics=("parallel",)),
    )(x, w1, b1, w2t, b2)
    return out


# ----------------------------------------------------------------------------
# Conditional path: 4 expert MLPs (Linear -> ReLU -> Dropout(id)) selected
# per-row by command[i], followed by a shared out_layer (H -> 1).
# ----------------------------------------------------------------------------
def _cond_kernel(x_ref, cmd_ref, w1p_ref, b1p_ref, w2t4_ref, b2_ref, o_ref):
    x = x_ref[...]                                                    # [TB, D]
    cmd = cmd_ref[...]                                                # [TB, 1] int32
    # One matmul computes hidden activations for all 4 experts: [TB, 4H].
    h_all = jnp.dot(x, w1p_ref[...], preferred_element_type=jnp.float32) + b1p_ref[...]
    h_all = jnp.maximum(h_all, 0.0)                                   # ReLU
    # Dropout(p) in eval mode == identity.
    n_lanes = h_all.shape[-1]
    H = n_lanes // 4
    # (1, 4H) constant iota (2 vregs), broadcast-compared against cmd [TB, 1].
    lane = jax.lax.broadcasted_iota(jnp.int32, (1, n_lanes), 1)
    expert_of_lane = lane // H                                        # [1, 4H]
    mask = expert_of_lane == cmd                                      # [TB, 4H] predicate
    # Fused expert-select + shared out_layer (w2t4 is w2 row tiled 4x on lanes).
    out = jnp.sum(jnp.where(mask, h_all * w2t4_ref[...], 0.0),
                  axis=-1, keepdims=True) + b2_ref[...]
    o_ref[...] = out.astype(o_ref.dtype)


def affordance_forward_conditional(x, command, w1p, b1p, w2t4, b2, *, tb_max=1024):
    """x: [B, D];  command: [B] int32 in [0, 4);  packed params from
    pack_conditional_params."""
    B, D = x.shape
    n_lanes = w1p.shape[1]                                            # 4*H
    assert w2t4.shape == (1, n_lanes)

    cmd2d = command.astype(jnp.int32).reshape(B, 1)

    TB = _choose_batch_tile(B, tb_max)
    grid = (pl.cdiv(B, TB),)                  # no wrapper-side pad; tail masked

    out = pl.pallas_call(
        _cond_kernel,
        out_shape=jax.ShapeDtypeStruct((B, 1), jnp.float32),
        grid=grid,
        in_specs=[
            pl.BlockSpec((TB, D), lambda i: (i, 0)),
            pl.BlockSpec((TB, 1), lambda i: (i, 0)),
            # Resident packed experts + biases: single-buffered.
            pl.BlockSpec((D, n_lanes), lambda i: (0, 0), pipeline_mode=pl.Buffered(1)),
            pl.BlockSpec((1, n_lanes), lambda i: (0, 0), pipeline_mode=pl.Buffered(1)),
            pl.BlockSpec((1, n_lanes), lambda i: (0, 0), pipeline_mode=pl.Buffered(1)),
            pl.BlockSpec((1, 1), lambda i: (0, 0), pipeline_mode=pl.Buffered(1)),
        ],
        out_specs=pl.BlockSpec((TB, 1), lambda i: (i, 0)),
        compiler_params=pltpu.CompilerParams(dimension_semantics=("parallel",)),
    )(x, cmd2d, w1p, b1p, w2t4, b2)
    return out


# ----------------------------------------------------------------------------
# Pure-JAX references (eval-mode semantics, matching PyTorch forward).
# ----------------------------------------------------------------------------
def _ref_noncond(x, w1, b1, w2, b2):
    h = jnp.maximum(x @ w1 + b1, 0.0)
    return h @ w2 + b2


def _ref_cond(x, command, w1_all, b1_all, w2, b2):
    w1 = w1_all[command]              # [B, D, H]
    b1 = b1_all[command]              # [B, H]
    h = jnp.maximum(jnp.einsum("bd,bdh->bh", x, w1) + b1, 0.0)
    return h @ w2 + b2


if __name__ == "__main__":
    # Shapes consistent with module defaults (input_dim=512, hidden=64, out=1).
    B, D, H, O, n_exp = 32, 512, 64, 1, 4
    key = jax.random.PRNGKey(0)
    ks = jax.random.split(key, 8)

    x = jax.random.normal(ks[0], (B, D), dtype=jnp.float32)

    # --- non-conditional parameters ---
    w1 = jax.random.normal(ks[1], (D, H), dtype=jnp.float32) * 0.05
    b1 = jax.random.normal(ks[2], (H,), dtype=jnp.float32) * 0.05
    w2 = jax.random.normal(ks[3], (H, O), dtype=jnp.float32) * 0.05
    b2 = jax.random.normal(ks[4], (O,), dtype=jnp.float32) * 0.05

    # f32 path
    params32 = pack_affordance_params(w1, b1, w2, b2)          # hoisted packing
    out = affordance_forward(x, *params32)
    jax.block_until_ready(out)
    ref = _ref_noncond(x, w1, b1, w2, b2)
    assert out.shape == (B, O)
    assert jnp.allclose(out, ref, atol=1e-5, rtol=1e-5)

    # bf16 MXU operands, f32 accumulate + f32 epilogue
    params_bf = pack_affordance_params(w1, b1, w2, b2, compute_dtype=jnp.bfloat16)
    x_bf = x.astype(jnp.bfloat16)
    out_bf = affordance_forward(x_bf, *params_bf)
    jax.block_until_ready(out_bf)
    ref_bf = _ref_noncond(x_bf.astype(jnp.float32),
                          w1.astype(jnp.bfloat16).astype(jnp.float32), b1, w2, b2)
    assert jnp.allclose(out_bf, ref_bf, atol=2e-2, rtol=2e-2)

    # --- conditional parameters: 4 expert branches + shared out_layer ---
    w1_all = jax.random.normal(ks[5], (n_exp, D, H), dtype=jnp.float32) * 0.05
    b1_all = jax.random.normal(ks[6], (n_exp, H), dtype=jnp.float32) * 0.05
    command = jax.random.randint(ks[7], (B,), 0, n_exp, dtype=jnp.int32)

    # f32 path
    cparams32 = pack_conditional_params(w1_all, b1_all, w2, b2)  # hoisted packing
    out_c = affordance_forward_conditional(x, command, *cparams32)
    jax.block_until_ready(out_c)
    ref_c = _ref_cond(x, command, w1_all, b1_all, w2, b2)
    assert out_c.shape == (B, O)
    assert jnp.allclose(out_c, ref_c, atol=1e-5, rtol=1e-5)

    # bf16 MXU operands, f32 accumulate + f32 epilogue
    cparams_bf = pack_conditional_params(w1_all, b1_all, w2, b2,
                                         compute_dtype=jnp.bfloat16)
    out_cb = affordance_forward_conditional(x_bf, command, *cparams_bf)
    jax.block_until_ready(out_cb)
    ref_cb = _ref_cond(x_bf.astype(jnp.float32), command,
                       w1_all.astype(jnp.bfloat16).astype(jnp.float32),
                       b1_all, w2, b2)
    assert jnp.allclose(out_cb, ref_cb, atol=2e-2, rtol=2e-2)

    print("KERNEL_OK")
</pallas_src>

<mosaic_0001>
module attributes {stable_mosaic.version = 11 : i64} {
  func.func @_mlp_kernel(%arg0: i32, %arg1: memref<16x512xf32, #tpu.memory_space<vmem>>, %arg2: memref<512x64xf32, #tpu.memory_space<vmem>>, %arg3: memref<1x64xf32, #tpu.memory_space<vmem>>, %arg4: memref<1x64xf32, #tpu.memory_space<vmem>>, %arg5: memref<1x1xf32, #tpu.memory_space<vmem>>, %arg6: memref<16x1xf32, #tpu.memory_space<vmem>>) attributes {dimension_semantics = [#tpu.dimension_semantics<parallel>], iteration_bounds = array<i64: 2>, scalar_prefetch = 0 : i64, scratch_operands = 0 : i64, tpu.core_type = #tpu.core_type<tc>, window_params = [{transform_indices = @transform_0, window_bounds = array<i64: 16, 512>}, {pipeline_mode = #tpu.pipeline_mode<synchronous>, transform_indices = @transform_1, window_bounds = array<i64: 512, 64>}, {pipeline_mode = #tpu.pipeline_mode<synchronous>, transform_indices = @transform_2, window_bounds = array<i64: 1, 64>}, {pipeline_mode = #tpu.pipeline_mode<synchronous>, transform_indices = @transform_3, window_bounds = array<i64: 1, 64>}, {pipeline_mode = #tpu.pipeline_mode<synchronous>, transform_indices = @transform_4, window_bounds = array<i64: 1, 1>}, {transform_indices = @transform_5, window_bounds = array<i64: 16, 1>}]} {
    %c0 = arith.constant 0 : index
    %c0_0 = arith.constant 0 : index
    %0 = vector.load %arg1[%c0, %c0_0] : memref<16x512xf32, #tpu.memory_space<vmem>>, vector<16x512xf32>
    %c0_1 = arith.constant 0 : index
    %c0_2 = arith.constant 0 : index
    %1 = vector.load %arg2[%c0_1, %c0_2] : memref<512x64xf32, #tpu.memory_space<vmem>>, vector<512x64xf32>
    %cst = arith.constant dense<0.000000e+00> : vector<16x64xf32>
    %2 = tpu.matmul %0, %1, %cst {dimension_numbers = #tpu.dot_dimension_numbers<[1], [0], [0], [1], [0, 0, 1, 1], [], []>} : vector<16x512xf32>, vector<512x64xf32>, vector<16x64xf32> -> vector<16x64xf32>
    %c0_3 = arith.constant 0 : index
    %c0_4 = arith.constant 0 : index
    %3 = vector.load %arg3[%c0_3, %c0_4] : memref<1x64xf32, #tpu.memory_space<vmem>>, vector<1x64xf32>
    %4 = vector.broadcast %3 : vector<1x64xf32> to vector<16x64xf32>
    %5 = arith.addf %2, %4 : vector<16x64xf32>
    %cst_5 = arith.constant 0.000000e+00 : f32
    %6 = vector.broadcast %cst_5 : f32 to vector<16x64xf32>
    %7 = arith.maximumf %5, %6 : vector<16x64xf32>
    %c0_6 = arith.constant 0 : index
    %c0_7 = arith.constant 0 : index
    %8 = vector.load %arg4[%c0_6, %c0_7] : memref<1x64xf32, #tpu.memory_space<vmem>>, vector<1x64xf32>
    %9 = vector.broadcast %8 : vector<1x64xf32> to vector<16x64xf32>
    %10 = arith.mulf %7, %9 : vector<16x64xf32>
    %cst_8 = arith.constant dense<0.000000e+00> : vector<16xf32>
    %11 = vector.multi_reduction <add>, %10, %cst_8 [1] : vector<16x64xf32> to vector<16xf32>
    %12 = vector.shape_cast %11 : vector<16xf32> to vector<16x1xf32>
    %c0_9 = arith.constant 0 : index
    %c0_10 = arith.constant 0 : index
    %13 = vector.load %arg5[%c0_9, %c0_10] : memref<1x1xf32, #tpu.memory_space<vmem>>, vector<1x1xf32>
    %14 = vector.broadcast %13 : vector<1x1xf32> to vector<16x1xf32>
    %15 = arith.addf %12, %14 : vector<16x1xf32>
    %c0_11 = arith.constant 0 : index
    %c0_12 = arith.constant 0 : index
    %16 = vector.load %arg6[%c0_11, %c0_12] : memref<16x1xf32, #tpu.memory_space<vmem>>, vector<16x1xf32>
    tpu.vector_store %arg6[%c0_11, %c0_12], %15 {strides = array<i32>} : memref<16x1xf32, #tpu.memory_space<vmem>>, vector<16x1xf32>,
    return
  }
  func.func @transform_0(%arg0: i32) -> (i32, i32) {
    %c0_i32 = arith.constant 0 : i32
    %c0_i32_0 = arith.constant 0 : i32
    return %arg0, %c0_i32 : i32, i32
  }
  func.func @transform_1(%arg0: i32) -> (i32, i32) {
    %c0_i32 = arith.constant 0 : i32
    %c0_i32_0 = arith.constant 0 : i32
    %c0_i32_1 = arith.constant 0 : i32
    return %c0_i32, %c0_i32_0 : i32, i32
  }
  func.func @transform_2(%arg0: i32) -> (i32, i32) {
    %c0_i32 = arith.constant 0 : i32
    %c0_i32_0 = arith.constant 0 : i32
    %c0_i32_1 = arith.constant 0 : i32
    return %c0_i32, %c0_i32_0 : i32, i32
  }
  func.func @transform_3(%arg0: i32) -> (i32, i32) {
    %c0_i32 = arith.constant 0 : i32
    %c0_i32_0 = arith.constant 0 : i32
    %c0_i32_1 = arith.constant 0 : i32
    return %c0_i32, %c0_i32_0 : i32, i32
  }
  func.func @transform_4(%arg0: i32) -> (i32, i32) {
    %c0_i32 = arith.constant 0 : i32
    %c0_i32_0 = arith.constant 0 : i32
    %c0_i32_1 = arith.constant 0 : i32
    return %c0_i32, %c0_i32_0 : i32, i32
  }
  func.func @transform_5(%arg0: i32) -> (i32, i32) {
    %c0_i32 = arith.constant 0 : i32
    %c0_i32_0 = arith.constant 0 : i32
    return %arg0, %c0_i32 : i32, i32
  }
}

</mosaic_0001>

<llo_original>
// kernel: tpu_custom_call.1
$region0: #{tpu_custom_call.1}
  #allocation0 [shape = 'u32[]', space=smem, size = 0x4, offset = 0x4, fixed_abs, tag = 'smem constant byte address 0x4 - core index']
  #allocation1 [shape = 'u32[144,128]{1,0:T(1,128)}', space=vmem, size = 0x12000, scoped, tag = 'internal scratch']
  #allocation2 [shape = 'f32[1,1]{1,0:T(1,128)S(1)}', space=vmem, size = 0x200, scoped, tag = 'scoped memory for tpu_custom_call.1']
  %s0 = inlined_call_operand.vmem [shape: f32[32,512], index: 0, kind: input, shape index: {}]
  %s1 = inlined_call_operand.vmem [shape: f32[512,64], index: 1, kind: input, shape index: {}]
  %s2 = inlined_call_operand.vmem [shape: f32[1,64], index: 2, kind: input, shape index: {}]
  %s3 = inlined_call_operand.vmem [shape: f32[1,64], index: 3, kind: input, shape index: {}]
  %s4 = inlined_call_operand.<no memory space> [shape: f32[1,1], index: 4, kind: input, shape index: {}]
  %s5 = inlined_call_operand.vmem [shape: f32[32,1], index: 5, kind: output, shape index: {}]
  %s6 = sld [smem:[#allocation0]]
  $region53: #{tpu_custom_call.1} parent=0
    _
  %s8 = ssub.s32 1, %s6
  %s9 = scalar_select 0, %s8, %s6
  %v10 = vstv %s4
  %11 = vst [vmem:[#allocation2] sm:$0x1] %v10
  loop: start=0, step=1, limit=4
  $region2: #{tpu_custom_call.1} parent=0 // loop_pre_header
    _
  $region3: #{tpu_custom_call.1} parent=0 // loop_header
    %s13 = sphi 0, %s17
    %p14 = scmp.ge.s32.totalorder %s13, 4
    %s23 = sphi 0, %s25
    %s26 = sphi 0, %s23
    %s27 = sphi 0, %s26
    %s43 = sphi 0, %s27
    %s47 = sphi 0, %s47
    %s49 = sphi 0, %s47
    %s50 = sphi 0, %s49
    %s64 = sphi 0, %s50
    %s68 = sphi 0, %s68
    %s70 = sphi 0, %s68
    %s71 = sphi 0, %s70
    %s85 = sphi 0, %s71
    %s89 = sphi 0, %s89
    %s91 = sphi 0, %s89
    %s92 = sphi 0, %s91
    %s106 = sphi 0, %s92
    %s110 = sphi 0, %s110
    %s112 = sphi 0, %s110
    %s113 = sphi 0, %s112
    %s127 = sphi 0, %s113
    %s133 = sphi 0, %s135
    %s136 = sphi 0, %s133
    %s137 = sphi 0, %s136
    %s153 = sphi 0, %s137
  $region4: #{tpu_custom_call.1} parent=0 // loop_header_branch
    %16 = sbr.rel (%p14) target = $region8
  $region5: #{tpu_custom_call.1} parent=0 // loop_body
    %s18 = ssub.s32 %s13, 1
    %s19 = ssub.s32 %s13, 2
    %s20 = sadd.s32 %s13, 1
    %s21 = ssub.s32 %s13, %s20
    %p22 = scmp.eq.s32.totalorder %s21, 0
    %s24 = sadd.s32 %s23, 1
    %s25 = scalar_select %p22, %s23, %s24
    %p28 = pneg %p22
    %p29 = scmp.eq.s32.totalorder %s13, 1
    %p30 = por %p28, %p29
    %p31 = scmp.ne.s32.totalorder %s23, %s26
    %p32 = scmp.eq.s32.totalorder %s13, 0
    %p33 = por %p31, %p32
    %p34 = scmp.ne.s32.totalorder %s23, %s26
    %p35 = scmp.eq.s32.totalorder %s18, 1
    %p36 = por %p34, %p35
    %p37 = scmp.ne.s32.totalorder %s26, %s27
    %p38 = scmp.eq.s32.totalorder %s18, 0
    %p39 = por %p37, %p38
    %p40 = scmp.ne.s32.totalorder %s26, %s27
    %p41 = scmp.eq.s32.totalorder %s19, 1
    %p42 = por %p40, %p41
    %p44 = scmp.ne.s32.totalorder %s27, %s43
    %p45 = scmp.eq.s32.totalorder %s19, 0
    %p46 = por %p44, %p45
    %s48 = sadd.s32 %s47, 1
    %p51 = scmp.eq.s32.totalorder %s13, 1
    %p52 = scmp.ne.s32.totalorder %s47, %s49
    %p53 = scmp.eq.s32.totalorder %s13, 0
    %p54 = por %p52, %p53
    %p55 = scmp.ne.s32.totalorder %s47, %s49
    %p56 = scmp.eq.s32.totalorder %s18, 1
    %p57 = por %p55, %p56
    %p58 = scmp.ne.s32.totalorder %s49, %s50
    %p59 = scmp.eq.s32.totalorder %s18, 0
    %p60 = por %p58, %p59
    %p61 = scmp.ne.s32.totalorder %s49, %s50
    %p62 = scmp.eq.s32.totalorder %s19, 1
    %p63 = por %p61, %p62
    %p65 = scmp.ne.s32.totalorder %s50, %s64
    %p66 = scmp.eq.s32.totalorder %s19, 0
    %p67 = por %p65, %p66
    %s69 = sadd.s32 %s68, 1
    %p72 = scmp.eq.s32.totalorder %s13, 1
    %p73 = scmp.ne.s32.totalorder %s68, %s70
    %p74 = scmp.eq.s32.totalorder %s13, 0
    %p75 = por %p73, %p74
    %p76 = scmp.ne.s32.totalorder %s68, %s70
    %p77 = scmp.eq.s32.totalorder %s18, 1
    %p78 = por %p76, %p77
    %p79 = scmp.ne.s32.totalorder %s70, %s71
    %p80 = scmp.eq.s32.totalorder %s18, 0
    %p81 = por %p79, %p80
    %p82 = scmp.ne.s32.totalorder %s70, %s71
    %p83 = scmp.eq.s32.totalorder %s19, 1
    %p84 = por %p82, %p83
    %p86 = scmp.ne.s32.totalorder %s71, %s85
    %p87 = scmp.eq.s32.totalorder %s19, 0
    %p88 = por %p86, %p87
    %s90 = sadd.s32 %s89, 1
    %p93 = scmp.eq.s32.totalorder %s13, 1
    %p94 = scmp.ne.s32.totalorder %s89, %s91
    %p95 = scmp.eq.s32.totalorder %s13, 0
    %p96 = por %p94, %p95
    %p97 = scmp.ne.s32.totalorder %s89, %s91
    %p98 = scmp.eq.s32.totalorder %s18, 1
    %p99 = por %p97, %p98
    %p100 = scmp.ne.s32.totalorder %s91, %s92
    %p101 = scmp.eq.s32.totalorder %s18, 0
    %p102 = por %p100, %p101
    %p103 = scmp.ne.s32.totalorder %s91, %s92
    %p104 = scmp.eq.s32.totalorder %s19, 1
    %p105 = por %p103, %p104
    %p107 = scmp.ne.s32.totalorder %s92, %s106
    %p108 = scmp.eq.s32.totalorder %s19, 0
    %p109 = por %p107, %p108
    %s111 = sadd.s32 %s110, 1
    %p114 = scmp.eq.s32.totalorder %s13, 1
    %p115 = scmp.ne.s32.totalorder %s110, %s112
    %p116 = scmp.eq.s32.totalorder %s13, 0
    %p117 = por %p115, %p116
    %p118 = scmp.ne.s32.totalorder %s110, %s112
    %p119 = scmp.eq.s32.totalorder %s18, 1
    %p120 = por %p118, %p119
    %p121 = scmp.ne.s32.totalorder %s112, %s113
    %p122 = scmp.eq.s32.totalorder %s18, 0
    %p123 = por %p121, %p122
    %p124 = scmp.ne.s32.totalorder %s112, %s113
    %p125 = scmp.eq.s32.totalorder %s19, 1
    %p126 = por %p124, %p125
    %p128 = scmp.ne.s32.totalorder %s113, %s127
    %p129 = scmp.eq.s32.totalorder %s19, 0
    %p130 = por %p128, %p129
    %s131 = ssub.s32 %s13, %s20
    %p132 = scmp.eq.s32.totalorder %s131, 0
    %s134 = sadd.s32 %s133, 1
    %s135 = scalar_select %p132, %s133, %s134
    %p138 = pneg %p132
    %p139 = scmp.eq.s32.totalorder %s13, 1
    %p140 = por %p138, %p139
    %p141 = scmp.ne.s32.totalorder %s133, %s136
    %p142 = scmp.eq.s32.totalorder %s13, 0
    %p143 = por %p141, %p142
    %p144 = scmp.ne.s32.totalorder %s133, %s136
    %p145 = scmp.eq.s32.totalorder %s18, 1
    %p146 = por %p144, %p145
    %p147 = scmp.ne.s32.totalorder %s136, %s137
    %p148 = scmp.eq.s32.totalorder %s18, 0
    %p149 = por %p147, %p148
    %p150 = scmp.ne.s32.totalorder %s136, %s137
    %p151 = scmp.eq.s32.totalorder %s19, 1
    %p152 = por %p150, %p151
    %p154 = scmp.ne.s32.totalorder %s137, %s153
    %p155 = scmp.eq.s32.totalorder %s19, 0
    %p156 = por %p154, %p155
    %p157 = scmp.le.s32.totalorder 1, %s13
    %p158 = scmp.lt.s32.totalorder %s13, 3
    %p159 = pnand %p157, %p158
    %p160 = pneg %p159
    // Predicated region
    $region9: #{tpu_custom_call.1} parent=5 // pred_check
      _
    $region10: #{tpu_custom_call.1} parent=5 // pred_check_branch
      %162 = sbr.rel (%p159) target = $region12
    $region11: #{tpu_custom_call.1} parent=5 // pred_region
      %s163 = ssub.s32 %s13, 1
      // Predicated region
      $region13: #{tpu_custom_call.1} parent=11 // pred_check
        %p164 = pneg %p60
      $region14: #{tpu_custom_call.1} parent=11 // pred_check_branch
        %166 = sbr.rel (%p164) target = $region16
      $region15: #{tpu_custom_call.1} parent=11 // pred_region
        _
      $region16: #{tpu_custom_call.1} parent=11 // pred_fallthru
        _
      // Predicated region
      $region17: #{tpu_custom_call.1} parent=11 // pred_check
        %p167 = pneg %p81
      $region18: #{tpu_custom_call.1} parent=11 // pred_check_branch
        %169 = sbr.rel (%p167) target = $region20
      $region19: #{tpu_custom_call.1} parent=11 // pred_region
        _
      $region20: #{tpu_custom_call.1} parent=11 // pred_fallthru
        _
      // Predicated region
      $region21: #{tpu_custom_call.1} parent=11 // pred_check
        %p170 = pneg %p102
      $region22: #{tpu_custom_call.1} parent=11 // pred_check_branch
        %172 = sbr.rel (%p170) target = $region24
      $region23: #{tpu_custom_call.1} parent=11 // pred_region
        _
      $region24: #{tpu_custom_call.1} parent=11 // pred_fallthru
        _
      // Predicated region
      $region25: #{tpu_custom_call.1} parent=11 // pred_check
        %p173 = pneg %p123
      $region26: #{tpu_custom_call.1} parent=11 // pred_check_branch
        %175 = sbr.rel (%p173) target = $region28
      $region27: #{tpu_custom_call.1} parent=11 // pred_region
        _
      $region28: #{tpu_custom_call.1} parent=11 // pred_fallthru
        _
    $region12: #{tpu_custom_call.1} parent=5 // pred_fallthru
      _
    %p176 = scmp.lt.s32.totalorder %s13, 2
    // Predicated region
    $region29: #{tpu_custom_call.1} parent=5 // pred_check
      %p177 = pneg %p176
    $region30: #{tpu_custom_call.1} parent=5 // pred_check_branch
      %179 = sbr.rel (%p177) target = $region32
    $region31: #{tpu_custom_call.1} parent=5 // pred_region
      // Predicated region
      $region33: #{tpu_custom_call.1} parent=31 // pred_check
        %p180 = pneg %p33
      $region34: #{tpu_custom_call.1} parent=31 // pred_check_branch
        %182 = sbr.rel (%p180) target = $region36
      $region35: #{tpu_custom_call.1} parent=31 // pred_region
        %s183 = smul.u32 2, %s13
        %p184 = scmp.lt.s32.totalorder %s183, 3
        %s185 = scalar_select %p184, %s183, 3
        %s186 = smul.addr %s185, 4
        %s187 = smul.addr %s186, 8
        %s188 = scalar_lea.vmem %s0, %s187
        %s189 = smul.u32 2, %s13
      $region36: #{tpu_custom_call.1} parent=31 // pred_fallthru
        _
    $region32: #{tpu_custom_call.1} parent=5 // pred_fallthru
      _
    %p190 = scmp.le.s32.totalorder 1, %s13
    %p191 = scmp.lt.s32.totalorder %s13, 3
    %p192 = pnand %p190, %p191
    %p193 = pneg %p192
    // Predicated region
    $region37: #{tpu_custom_call.1} parent=5 // pred_check
      _
    $region38: #{tpu_custom_call.1} parent=5 // pred_check_branch
      %195 = sbr.rel (%p192) target = $region40
    $region39: #{tpu_custom_call.1} parent=5 // pred_region
      %s196 = ssub.s32 %s13, 1
      %s197 = smul.u32 2, %s18
      %p198 = scmp.lt.s32.totalorder %s197, 3
      %s199 = scalar_select %p198, %s197, 3
      %s200 = smul.addr %s199, 4
      %s201 = smul.addr %s200, 8
      %s202 = scalar_lea.vmem %s0, %s201
      %p203 = pneg %p39
      %p204 = pneg %p36
      %p205 = pneg %p60
      %p206 = pneg %p57
      %p207 = pneg %p81
      %p208 = pneg %p78
      %p209 = pneg %p102
      %p210 = pneg %p99
      %p211 = pneg %p123
      %p212 = pneg %p120
      %p213 = pneg %p149
      %p214 = pneg %p146
      %s215 = smul.u32 2, %s18
      %p216 = scmp.lt.s32.totalorder %s215, 3
      %s217 = scalar_select %p216, %s215, 3
      %s218 = smul.addr %s217, 8
      %s219 = scalar_lea.vmem %s5, %s218
      %s220 = smul.u32 2, %s18
      %p221 = scmp.lt.s32.totalorder %s220, 3
      %s222 = scalar_select %p221, %s220, 3
      %s223 = smul.addr %s222, 4
      %s224 = smul.addr %s223, 8
      %s225 = scalar_lea.vmem %s0, %s224
      %s226 = smul.u32 2, %s18
      %s227 = smul.u32 2, %s18
      %p228 = scmp.lt.s32.totalorder %s227, 3
      %s229 = scalar_select %p228, %s227, 3
      %s230 = smul.addr %s229, 8
      %s231 = scalar_lea.vmem %s5, %s230
      %s232 = smul.u32 2, %s18
      %v233 = vld [vmem:[%s225] sm:$0xff]
      %v234 = vld [vmem:[%s225 + $0x8] sm:$0xff]
      %v235 = vld [vmem:[%s225 + $0x10] sm:$0xff]
      %v236 = vld [vmem:[%s225 + $0x18] sm:$0xff]
      %v237 = vld [vmem:[%s225 + $0x20] sm:$0xff]
      %v238 = vld [vmem:[%s225 + $0x28] sm:$0xff]
      %v239 = vld [vmem:[%s225 + $0x30] sm:$0xff]
      %v240 = vld [vmem:[%s225 + $0x38] sm:$0xff]
      %v241 = vld [vmem:[%s1] sm:$0xff]
      %v242 = vld [vmem:[%s1 + $0x8] sm:$0xff]
      %v243 = vld [vmem:[%s1 + $0x10] sm:$0xff]
      %v244 = vld [vmem:[%s1 + $0x18] sm:$0xff]
      %v245 = vld [vmem:[%s1 + $0x20] sm:$0xff]
      %v246 = vld [vmem:[%s1 + $0x28] sm:$0xff]
      %v247 = vld [vmem:[%s1 + $0x30] sm:$0xff]
      %v248 = vld [vmem:[%s1 + $0x38] sm:$0xff]
      %v249 = vld [vmem:[%s1 + $0x40] sm:$0xff]
      %v250 = vld [vmem:[%s1 + $0x48] sm:$0xff]
      %v251 = vld [vmem:[%s1 + $0x50] sm:$0xff]
      %v252 = vld [vmem:[%s1 + $0x58] sm:$0xff]
      %v253 = vld [vmem:[%s1 + $0x60] sm:$0xff]
      %v254 = vld [vmem:[%s1 + $0x68] sm:$0xff]
      %v255 = vld [vmem:[%s1 + $0x70] sm:$0xff]
      %v256 = vld [vmem:[%s1 + $0x78] sm:$0xff]
      %v257 = vld [vmem:[%s1 + $0x80] sm:$0xff]
      %v258 = vld [vmem:[%s1 + $0x88] sm:$0xff]
      %v259 = vld [vmem:[%s1 + $0x90] sm:$0xff]
      %v260 = vld [vmem:[%s1 + $0x98] sm:$0xff]
      %v261 = vld [vmem:[%s1 + $0xa0] sm:$0xff]
      %v262 = vld [vmem:[%s1 + $0xa8] sm:$0xff]
      %v263 = vld [vmem:[%s1 + $0xb0] sm:$0xff]
      %v264 = vld [vmem:[%s1 + $0xb8] sm:$0xff]
      %v265 = vld [vmem:[%s1 + $0xc0] sm:$0xff]
      %v266 = vld [vmem:[%s1 + $0xc8] sm:$0xff]
      %v267 = vld [vmem:[%s1 + $0xd0] sm:$0xff]
      %v268 = vld [vmem:[%s1 + $0xd8] sm:$0xff]
      %v269 = vld [vmem:[%s1 + $0xe0] sm:$0xff]
      %v270 = vld [vmem:[%s1 + $0xe8] sm:$0xff]
      %v271 = vld [vmem:[%s1 + $0xf0] sm:$0xff]
      %v272 = vld [vmem:[%s1 + $0xf8] sm:$0xff]
      %v273 = vld [vmem:[%s1 + $0x100] sm:$0xff]
      %v274 = vld [vmem:[%s1 + $0x108] sm:$0xff]
      %v275 = vld [vmem:[%s1 + $0x110] sm:$0xff]
      %v276 = vld [vmem:[%s1 + $0x118] sm:$0xff]
      %v277 = vld [vmem:[%s1 + $0x120] sm:$0xff]
      %v278 = vld [vmem:[%s1 + $0x128] sm:$0xff]
      %v279 = vld [vmem:[%s1 + $0x130] sm:$0xff]
      %v280 = vld [vmem:[%s1 + $0x138] sm:$0xff]
      %v281 = vld [vmem:[%s1 + $0x140] sm:$0xff]
      %v282 = vld [vmem:[%s1 + $0x148] sm:$0xff]
      %v283 = vld [vmem:[%s1 + $0x150] sm:$0xff]
      %v284 = vld [vmem:[%s1 + $0x158] sm:$0xff]
      %v285 = vld [vmem:[%s1 + $0x160] sm:$0xff]
      %v286 = vld [vmem:[%s1 + $0x168] sm:$0xff]
      %v287 = vld [vmem:[%s1 + $0x170] sm:$0xff]
      %v288 = vld [vmem:[%s1 + $0x178] sm:$0xff]
      %v289 = vld [vmem:[%s1 + $0x180] sm:$0xff]
      %v290 = vld [vmem:[%s1 + $0x188] sm:$0xff]
      %v291 = vld [vmem:[%s1 + $0x190] sm:$0xff]
      %v292 = vld [vmem:[%s1 + $0x198] sm:$0xff]
      %v293 = vld [vmem:[%s1 + $0x1a0] sm:$0xff]
      %v294 = vld [vmem:[%s1 + $0x1a8] sm:$0xff]
      %v295 = vld [vmem:[%s1 + $0x1b0] sm:$0xff]
      %v296 = vld [vmem:[%s1 + $0x1b8] sm:$0xff]
      %v297 = vld [vmem:[%s1 + $0x1c0] sm:$0xff]
      %v298 = vld [vmem:[%s1 + $0x1c8] sm:$0xff]
      %v299 = vld [vmem:[%s1 + $0x1d0] sm:$0xff]
      %v300 = vld [vmem:[%s1 + $0x1d8] sm:$0xff]
      %v301 = vld [vmem:[%s1 + $0x1e0] sm:$0xff]
      %v302 = vld [vmem:[%s1 + $0x1e8] sm:$0xff]
      %v303 = vld [vmem:[%s1 + $0x1f0] sm:$0xff]
      %v304 = vld [vmem:[%s1 + $0x1f8] sm:$0xff]
      %v305 = vld [vmem:[%s2] sm:$0x1]
      %v307 = vlaneseq
      %v308 = vshrl.u32 %v307, 7
      %v309 = vsub.s32 0, %v308
      %v310 = vrot.slane %v305, %v309
      %312 = vmatprep.subr.mxu0 0.0
      %313 = vmatpush1.msra.mxu0 %v241
      %314 = vmatprep.subr.mxu0 0.0
      %315 = vmatpush1.msra.mxu0 %v242
      %316 = vmatprep.subr.mxu0 0.0
      %317 = vmatpush1.msra.mxu0 %v243
      %318 = vmatprep.subr.mxu0 0.0
      %319 = vmatpush1.msra.mxu0 %v244
      %320 = vmatprep.subr.mxu0 0.0
      %321 = vmatpush1.msra.mxu0 %v245
      %322 = vmatprep.subr.mxu0 0.0
      %323 = vmatpush1.msra.mxu0 %v246
      %324 = vmatprep.subr.mxu0 0.0
      %325 = vmatpush1.msra.mxu0 %v247
      %326 = vmatprep.subr.mxu0 0.0
      %327 = vmatpush1.msra.mxu0 %v248
      %328 = vmatprep.subr.mxu0 0.0
      %329 = vmatpush1.msra.mxu0 %v249
      %330 = vmatprep.subr.mxu0 0.0
      %331 = vmatpush1.msra.mxu0 %v250
      %332 = vmatprep.subr.mxu0 0.0
      %333 = vmatpush1.msra.mxu0 %v251
      %334 = vmatprep.subr.mxu0 0.0
      %335 = vmatpush1.msra.mxu0 %v252
      %336 = vmatprep.subr.mxu0 0.0
      %337 = vmatpush1.msra.mxu0 %v253
      %338 = vmatprep.subr.mxu0 0.0
      %339 = vmatpush1.msra.mxu0 %v254
      %340 = vmatprep.subr.mxu0 0.0
      %341 = vmatpush1.msra.mxu0 %v255
      %342 = vmatprep.subr.mxu0 0.0
      %343 = vmatpush1.msra.mxu0 %v256
      %344 = vmatprep.subr.mxu0 0.0
      %345 = vmatpush1.msra.mxu0 %v257
      %346 = vmatprep.subr.mxu0 0.0
      %347 = vmatpush1.msra.mxu0 %v258
      %348 = vmatprep.subr.mxu0 0.0
      %349 = vmatpush1.msra.mxu0 %v259
      %350 = vmatprep.subr.mxu0 0.0
      %351 = vmatpush1.msra.mxu0 %v260
      %352 = vmatprep.subr.mxu0 0.0
      %353 = vmatpush1.msra.mxu0 %v261
      %354 = vmatprep.subr.mxu0 0.0
      %355 = vmatpush1.msra.mxu0 %v262
      %356 = vmatprep.subr.mxu0 0.0
      %357 = vmatpush1.msra.mxu0 %v263
      %358 = vmatprep.subr.mxu0 0.0
      %359 = vmatpush1.msra.mxu0 %v264
      %360 = vmatprep.subr.mxu0 0.0
      %361 = vmatpush1.msra.mxu0 %v265
      %362 = vmatprep.subr.mxu0 0.0
      %363 = vmatpush1.msra.mxu0 %v266
      %364 = vmatprep.subr.mxu0 0.0
      %365 = vmatpush1.msra.mxu0 %v267
      %366 = vmatprep.subr.mxu0 0.0
      %367 = vmatpush1.msra.mxu0 %v268
      %368 = vmatprep.subr.mxu0 0.0
      %369 = vmatpush1.msra.mxu0 %v269
      %370 = vmatprep.subr.mxu0 0.0
      %371 = vmatpush1.msra.mxu0 %v270
      %372 = vmatprep.subr.mxu0 0.0
      %373 = vmatpush1.msra.mxu0 %v271
      %374 = vmatprep.subr.mxu0 0.0
      %375 = vmatpush1.msra.mxu0 %v272
      %376 = vmatprep.mubr.f32.mxu0 %v234
      %377 = vmatmul.mubr.f32.gmra.mrb[0].mxu0 %v233
      %v378 = vpop.f32.mrb[0].mxu0
      %v379 = vadd.f32 %v310, %v378
      %v380 = vpop.f32.mrb[0].mxu0
      %381 = vmatprep.mubr.f32.mxu0 %v238
      %382 = vmatmul.mubr.f32.gmra.mrb[0].mxu0 %v237
      %v383 = vpop.f32.mrb[0].mxu0
      %v384 = vadd.f32 %v310, %v383
      %v385 = vpop.f32.mrb[0].mxu0
      %386 = vdwg.mxu0
      %387 = vmatprep.subr.mxu0 0.0
      %388 = vmatpush1.msra.mxu0 %v273
      %389 = vmatprep.subr.mxu0 0.0
      %390 = vmatpush1.msra.mxu0 %v274
      %391 = vmatprep.subr.mxu0 0.0
      %392 = vmatpush1.msra.mxu0 %v275
      %393 = vmatprep.subr.mxu0 0.0
      %394 = vmatpush1.msra.mxu0 %v276
      %395 = vmatprep.subr.mxu0 0.0
      %396 = vmatpush1.msra.mxu0 %v277
      %397 = vmatprep.subr.mxu0 0.0
      %398 = vmatpush1.msra.mxu0 %v278
      %399 = vmatprep.subr.mxu0 0.0
      %400 = vmatpush1.msra.mxu0 %v279
      %401 = vmatprep.subr.mxu0 0.0
      %402 = vmatpush1.msra.mxu0 %v280
      %403 = vmatprep.subr.mxu0 0.0
      %404 = vmatpush1.msra.mxu0 %v281
      %405 = vmatprep.subr.mxu0 0.0
      %406 = vmatpush1.msra.mxu0 %v282
      %407 = vmatprep.subr.mxu0 0.0
      %408 = vmatpush1.msra.mxu0 %v283
      %409 = vmatprep.subr.mxu0 0.0
      %410 = vmatpush1.msra.mxu0 %v284
      %411 = vmatprep.subr.mxu0 0.0
      %412 = vmatpush1.msra.mxu0 %v285
      %413 = vmatprep.subr.mxu0 0.0
      %414 = vmatpush1.msra.mxu0 %v286
      %415 = vmatprep.subr.mxu0 0.0
      %416 = vmatpush1.msra.mxu0 %v287
      %417 = vmatprep.subr.mxu0 0.0
      %418 = vmatpush1.msra.mxu0 %v288
      %419 = vmatprep.subr.mxu0 0.0
      %420 = vmatpush1.msra.mxu0 %v289
      %421 = vmatprep.subr.mxu0 0.0
      %422 = vmatpush1.msra.mxu0 %v290
      %423 = vmatprep.subr.mxu0 0.0
      %424 = vmatpush1.msra.mxu0 %v291
      %425 = vmatprep.subr.mxu0 0.0
      %426 = vmatpush1.msra.mxu0 %v292
      %427 = vmatprep.subr.mxu0 0.0
      %428 = vmatpush1.msra.mxu0 %v293
      %429 = vmatprep.subr.mxu0 0.0
      %430 = vmatpush1.msra.mxu0 %v294
      %431 = vmatprep.subr.mxu0 0.0
      %432 = vmatpush1.msra.mxu0 %v295
      %433 = vmatprep.subr.mxu0 0.0
      %434 = vmatpush1.msra.mxu0 %v296
      %435 = vmatprep.subr.mxu0 0.0
      %436 = vmatpush1.msra.mxu0 %v297
      %437 = vmatprep.subr.mxu0 0.0
      %438 = vmatpush1.msra.mxu0 %v298
      %439 = vmatprep.subr.mxu0 0.0
      %440 = vmatpush1.msra.mxu0 %v299
      %441 = vmatprep.subr.mxu0 0.0
      %442 = vmatpush1.msra.mxu0 %v300
      %443 = vmatprep.subr.mxu0 0.0
      %444 = vmatpush1.msra.mxu0 %v301
      %445 = vmatprep.subr.mxu0 0.0
      %446 = vmatpush1.msra.mxu0 %v302
      %447 = vmatprep.subr.mxu0 0.0
      %448 = vmatpush1.msra.mxu0 %v303
      %449 = vmatprep.subr.mxu0 0.0
      %450 = vmatpush1.msra.mxu0 %v304
      %451 = vmatprep.mubr.f32.mxu0 %v236
      %452 = vmatmul.mubr.f32.gmra.mrb[0].mxu0 %v235
      %v453 = vpop.f32.mrb[0].mxu0
      %v454 = vadd.f32 %v379, %v453
      %v455 = vpop.f32.mrb[0].mxu0
      %456 = vmatprep.mubr.f32.mxu0 %v240
      %457 = vmatmul.mubr.f32.gmra.mrb[0].mxu0 %v239
      %v458 = vpop.f32.mrb[0].mxu0
      %v459 = vadd.f32 %v384, %v458
      %v460 = vpop.f32.mrb[0].mxu0
      %461 = vdwg.mxu0
      %v462 = vmax.f32 %v454, 0.0
      %v463 = vmax.f32 %v459, 0.0
      %v464 = vld [vmem:[%s3] sm:$0x1]
      %v466 = vlaneseq
      %v467 = vshrl.u32 %v466, 7
      %v468 = vsub.s32 0, %v467
      %v469 = vrot.slane %v464, %v468
      %v471 = vmul.f32 %v462, %v469
      %v472 = vmul.f32 %v463, %v469
      %vm473 = vcmask 523264
      %v474 = vsel %vm473, %v471, 0.0
      %475 = vadd.xlane.f32.xlu0 %v474
      %v476 = vpop.xlane.xlu0 %475
      %v477 = vsel %vm473, %v472, 0.0
      %478 = vadd.xlane.f32.xlu0 %v477
      %v479 = vpop.xlane.xlu0 %478
      %v480 = vld [vmem:[#allocation2] sm:$0x1]
      %v482 = vlaneseq
      %v483 = vshrl.u32 %v482, 7
      %v484 = vsub.s32 0, %v483
      %v485 = vrot.slane %v480, %v484
      %v487 = vadd.f32 %v476, %v485
      %v488 = vadd.f32 %v479, %v485
      %vm489 = vcmask 7168
      %490 = vst.msk [vmem:[%s231] sm:$0xff] %vm489, %v487
      %491 = vst.msk [vmem:[%s231 + $0x8] sm:$0xff] %vm489, %v488
      %s492 = smul.u32 2, %s18
      %p493 = scmp.lt.s32.totalorder %s492, 3
      %s494 = scalar_select %p493, %s492, 3
      %s495 = smul.addr %s494, 8
      %s496 = scalar_lea.vmem %s5, %s495
      // Predicated region
      $region41: #{tpu_custom_call.1} parent=39 // pred_check
        %p497 = pneg %p146
      $region42: #{tpu_custom_call.1} parent=39 // pred_check_branch
        %499 = sbr.rel (%p497) target = $region44
      $region43: #{tpu_custom_call.1} parent=39 // pred_region
        %s500 = smul.u32 2, %s18
      $region44: #{tpu_custom_call.1} parent=39 // pred_fallthru
        _
    $region40: #{tpu_custom_call.1} parent=5 // pred_fallthru
      _
    %p501 = scmp.le.s32.totalorder 2, %s13
    // Predicated region
    $region45: #{tpu_custom_call.1} parent=5 // pred_check
      %p502 = pneg %p501
    $region46: #{tpu_custom_call.1} parent=5 // pred_check_branch
      %504 = sbr.rel (%p502) target = $region48
    $region47: #{tpu_custom_call.1} parent=5 // pred_region
      %s505 = ssub.s32 %s13, 2
      // Predicated region
      $region49: #{tpu_custom_call.1} parent=47 // pred_check
        %p506 = pneg %p152
      $region50: #{tpu_custom_call.1} parent=47 // pred_check_branch
        %508 = sbr.rel (%p506) target = $region52
      $region51: #{tpu_custom_call.1} parent=47 // pred_region
        %s509 = smul.u32 2, %s19
        %p510 = scmp.lt.s32.totalorder %s509, 3
        %s511 = scalar_select %p510, %s509, 3
        %s512 = smul.addr %s511, 8
        %s513 = scalar_lea.vmem %s5, %s512
      $region52: #{tpu_custom_call.1} parent=47 // pred_fallthru
        _
    $region48: #{tpu_custom_call.1} parent=5 // pred_fallthru
      _
  $region6: #{tpu_custom_call.1} parent=0 // loop_footer
    %s17 = sadd.s32 1, %s13
  $region7: #{tpu_custom_call.1} parent=0 // loop_footer_branch
    %12 = sbr.rel target = $region3
  $region8: #{tpu_custom_call.1} parent=0 // loop_exit
    _

</llo_original>
